<compile_context>
chip_gen: v6e
topology: v6e:2x2x1
jax: 0.10.0
libtpu: 0.0.40
codegen_flags: <defaults>
</compile_context>

<pallas_src>
import jax
import jax.numpy as jnp
from jax.experimental import pallas as pl
from jax.experimental.pallas import tpu as pltpu

INPUT_DIM = 1200
OUTPUT_DIM = 2
HIDDEN = (50, 10, 5)

H_PAD = 128                     # lane-dense padded width for hidden/output layers
MAX_TB = 2048                   # batch-tile cap (~26-30 MiB live with f32 x tiles)
VMEM_LIMIT = 48 * 1024 * 1024   # explicit scoped-VMEM budget (physical >= 64 MiB on all gens)


def _round_up(n, m):
    return ((n + m - 1) // m) * m


def mlp_kernel(x_ref,
               w1_ref, b1_ref,
               w2_ref, b2_ref,
               w3_ref, b3_ref,
               w4_ref, b4_ref,
               o_ref):
    """Fused 4-layer MLP on one (TB, INPUT_DIM) batch tile.

    x_ref:  (TB, 1200) f32  (cast to bf16 in-VMEM for the MXU)
    w*_ref: bf16, zero-padded to 128-wide outputs
    b*_ref: (1, 128) f32 (zero in padded lanes)
    o_ref:  (TB, 128) bf16 (logits in lanes [0:2], zeros elsewhere)
    """
    # In-kernel cast: avoids a separate HBM convert pass in the wrapper.
    x = x_ref[...].astype(jnp.bfloat16)

    h = jnp.dot(x, w1_ref[...], preferred_element_type=jnp.float32)
    h = jnp.maximum(h + b1_ref[...], 0.0)                            # f32

    h = jnp.dot(h.astype(jnp.bfloat16), w2_ref[...],
                preferred_element_type=jnp.float32)
    h = jnp.maximum(h + b2_ref[...], 0.0)

    h = jnp.dot(h.astype(jnp.bfloat16), w3_ref[...],
                preferred_element_type=jnp.float32)
    h = jnp.maximum(h + b3_ref[...], 0.0)

    logits = jnp.dot(h.astype(jnp.bfloat16), w4_ref[...],
                     preferred_element_type=jnp.float32) + b4_ref[...]
    # Lane-dense bf16 store: halves writeback vs f32.
    o_ref[...] = logits.astype(jnp.bfloat16)


def prepare_params(params):
    """Pad every layer's output width to H_PAD and cast weights to bf16.

    Padding is exact: padded weight columns/rows and padded bias lanes are
    zero, so padded hidden lanes are ReLU(0)=0 and contribute nothing
    downstream; padded output lanes are exactly zero and sliced off.
    """
    dims_out = HIDDEN + (OUTPUT_DIM,)
    padded = []
    for (w, b), d_out in zip(params, dims_out):
        d_in = w.shape[0]
        d_in_pad = INPUT_DIM if d_in == INPUT_DIM else H_PAD
        w_p = jnp.zeros((d_in_pad, H_PAD), jnp.float32)
        w_p = w_p.at[:d_in, :d_out].set(w)
        b_p = jnp.zeros((1, H_PAD), jnp.float32)
        b_p = b_p.at[:, :d_out].set(b.reshape(1, d_out))
        padded.append((w_p.astype(jnp.bfloat16), b_p))
    return padded


def _batch_plan(batch):
    """Bucket the batch (power of two, >= 8) to bound recompiles, then pick a
    tile. When more than one tile is needed the step count is even so v7x's
    two TensorCores stay balanced; on v5e/v6e (1 TC) this is harmless."""
    b = max(8, pl.next_power_of_2(batch))
    if b <= MAX_TB:
        return b, b                       # single tile, grid=(1,)
    steps = pl.cdiv(b, MAX_TB)
    steps += steps % 2                    # even #steps for 2-TC megacore split
    tb = _round_up(pl.cdiv(b, steps), 8)
    return tb, tb * steps


@jax.jit
def mlp_forward(x, padded_params):
    """x: (B, INPUT_DIM) f32 -> logits (B, OUTPUT_DIM) f32."""
    (w1, b1), (w2, b2), (w3, b3), (w4, b4) = padded_params
    batch = x.shape[0]
    tb, b_pad = _batch_plan(batch)

    if b_pad != batch:
        x = jnp.pad(x, ((0, b_pad - batch), (0, 0)))

    grid = (b_pad // tb,)

    x_spec = pl.BlockSpec((tb, INPUT_DIM), lambda i: (i, 0))
    out_spec = pl.BlockSpec((tb, H_PAD), lambda i: (i, 0))
    # Weights/biases: constant index_map -> DMA'd once, resident across tiles.
    w1_spec = pl.BlockSpec((INPUT_DIM, H_PAD), lambda i: (0, 0))
    w_spec = pl.BlockSpec((H_PAD, H_PAD), lambda i: (0, 0))
    b_spec = pl.BlockSpec((1, H_PAD), lambda i: (0, 0))

    weight_bytes = (INPUT_DIM * H_PAD + 3 * H_PAD * H_PAD) * 2 + 4 * H_PAD * 4
    cost = pl.CostEstimate(
        flops=2 * b_pad * (INPUT_DIM * H_PAD + 3 * H_PAD * H_PAD),
        transcendentals=0,
        bytes_accessed=b_pad * INPUT_DIM * 4 + weight_bytes + b_pad * H_PAD * 2,
    )

    out_padded = pl.pallas_call(
        mlp_kernel,
        out_shape=jax.ShapeDtypeStruct((b_pad, H_PAD), jnp.bfloat16),
        grid=grid,
        in_specs=[x_spec,
                  w1_spec, b_spec,
                  w_spec, b_spec,
                  w_spec, b_spec,
                  w_spec, b_spec],
        out_specs=out_spec,
        compiler_params=pltpu.CompilerParams(
            dimension_semantics=("parallel",),
            vmem_limit_bytes=VMEM_LIMIT),
        cost_estimate=cost,
    )(x, w1, b1, w2, b2, w3, b3, w4, b4)

    return out_padded[:batch, :OUTPUT_DIM].astype(jnp.float32)


def init_params(key):
    """Deterministic PyTorch-style init: U(-1/sqrt(fan_in), 1/sqrt(fan_in))."""
    dims = (INPUT_DIM,) + HIDDEN + (OUTPUT_DIM,)
    params = []
    for i in range(len(dims) - 1):
        fan_in, fan_out = dims[i], dims[i + 1]
        key, kw, kb = jax.random.split(key, 3)
        bound = 1.0 / jnp.sqrt(jnp.float32(fan_in))
        w = jax.random.uniform(kw, (fan_in, fan_out), jnp.float32, -bound, bound)
        b = jax.random.uniform(kb, (1, fan_out), jnp.float32, -bound, bound)
        params.append((w, b))
    return params


def reference_forward(x, params):
    """Pure-JAX f32 reference matching the PyTorch module."""
    h = x
    for i, (w, b) in enumerate(params):
        h = h @ w + b
        if i < len(params) - 1:
            h = jnp.maximum(h, 0.0)
    return h


if __name__ == "__main__":
    key = jax.random.PRNGKey(0)
    key, kx = jax.random.split(key)

    batch = 8
    x = jax.random.normal(kx, (batch, INPUT_DIM), jnp.float32)
    params = init_params(key)
    padded_params = prepare_params(params)

    out = mlp_forward(x, padded_params)
    out = jax.block_until_ready(out)

    ref = reference_forward(x, params)
    assert out.shape == (batch, OUTPUT_DIM), out.shape
    # bf16 MXU inputs over a K=1200 contraction + bf16 output store
    # -> loosened tolerance; argmax/classification is unaffected.
    assert jnp.allclose(out, ref, atol=3e-2, rtol=3e-2), "mismatch vs reference"

    print("KERNEL_OK")
</pallas_src>

<mosaic_0001>
module attributes {stable_mosaic.version = 11 : i64} {
  func.func @mlp_kernel(%arg0: i32, %arg1: memref<8x1200xf32, #tpu.memory_space<vmem>>, %arg2: memref<1200x128xbf16, #tpu.memory_space<vmem>>, %arg3: memref<1x128xf32, #tpu.memory_space<vmem>>, %arg4: memref<128x128xbf16, #tpu.memory_space<vmem>>, %arg5: memref<1x128xf32, #tpu.memory_space<vmem>>, %arg6: memref<128x128xbf16, #tpu.memory_space<vmem>>, %arg7: memref<1x128xf32, #tpu.memory_space<vmem>>, %arg8: memref<128x128xbf16, #tpu.memory_space<vmem>>, %arg9: memref<1x128xf32, #tpu.memory_space<vmem>>, %arg10: memref<8x128xbf16, #tpu.memory_space<vmem>>) attributes {dimension_semantics = [#tpu.dimension_semantics<parallel>], iteration_bounds = array<i64: 1>, scalar_prefetch = 0 : i64, scratch_operands = 0 : i64, tpu.core_type = #tpu.core_type<tc>, window_params = [{transform_indices = @transform_0, window_bounds = array<i64: 8, 1200>}, {pipeline_mode = #tpu.pipeline_mode<synchronous>, transform_indices = @transform_1, window_bounds = array<i64: 1200, 128>}, {pipeline_mode = #tpu.pipeline_mode<synchronous>, transform_indices = @transform_2, window_bounds = array<i64: 1, 128>}, {pipeline_mode = #tpu.pipeline_mode<synchronous>, transform_indices = @transform_3, window_bounds = array<i64: 128, 128>}, {pipeline_mode = #tpu.pipeline_mode<synchronous>, transform_indices = @transform_4, window_bounds = array<i64: 1, 128>}, {pipeline_mode = #tpu.pipeline_mode<synchronous>, transform_indices = @transform_5, window_bounds = array<i64: 128, 128>}, {pipeline_mode = #tpu.pipeline_mode<synchronous>, transform_indices = @transform_6, window_bounds = array<i64: 1, 128>}, {pipeline_mode = #tpu.pipeline_mode<synchronous>, transform_indices = @transform_7, window_bounds = array<i64: 128, 128>}, {pipeline_mode = #tpu.pipeline_mode<synchronous>, transform_indices = @transform_8, window_bounds = array<i64: 1, 128>}, {transform_indices = @transform_9, window_bounds = array<i64: 8, 128>}]} {
    %c0 = arith.constant 0 : index
    %c0_0 = arith.constant 0 : index
    %0 = vector.load %arg1[%c0, %c0_0] : memref<8x1200xf32, #tpu.memory_space<vmem>>, vector<8x1200xf32>
    %1 = arith.truncf %0 : vector<8x1200xf32> to vector<8x1200xbf16>
    %c0_1 = arith.constant 0 : index
    %c0_2 = arith.constant 0 : index
    %2 = vector.load %arg2[%c0_1, %c0_2] : memref<1200x128xbf16, #tpu.memory_space<vmem>>, vector<1200x128xbf16>
    %cst = arith.constant dense<0.000000e+00> : vector<8x128xf32>
    %3 = tpu.matmul %1, %2, %cst {dimension_numbers = #tpu.dot_dimension_numbers<[1], [0], [0], [1], [0, 0, 1, 1], [], []>} : vector<8x1200xbf16>, vector<1200x128xbf16>, vector<8x128xf32> -> vector<8x128xf32>
    %c0_3 = arith.constant 0 : index
    %c0_4 = arith.constant 0 : index
    %4 = vector.load %arg3[%c0_3, %c0_4] : memref<1x128xf32, #tpu.memory_space<vmem>>, vector<1x128xf32>
    %5 = vector.broadcast %4 : vector<1x128xf32> to vector<8x128xf32>
    %6 = arith.addf %3, %5 : vector<8x128xf32>
    %cst_5 = arith.constant 0.000000e+00 : f32
    %7 = vector.broadcast %cst_5 : f32 to vector<8x128xf32>
    %8 = arith.maximumf %6, %7 : vector<8x128xf32>
    %9 = arith.truncf %8 : vector<8x128xf32> to vector<8x128xbf16>
    %c0_6 = arith.constant 0 : index
    %c0_7 = arith.constant 0 : index
    %10 = vector.load %arg4[%c0_6, %c0_7] : memref<128x128xbf16, #tpu.memory_space<vmem>>, vector<128x128xbf16>
    %cst_8 = arith.constant dense<0.000000e+00> : vector<8x128xf32>
    %11 = tpu.matmul %9, %10, %cst_8 {dimension_numbers = #tpu.dot_dimension_numbers<[1], [0], [0], [1], [0, 0, 1, 1], [], []>} : vector<8x128xbf16>, vector<128x128xbf16>, vector<8x128xf32> -> vector<8x128xf32>
    %c0_9 = arith.constant 0 : index
    %c0_10 = arith.constant 0 : index
    %12 = vector.load %arg5[%c0_9, %c0_10] : memref<1x128xf32, #tpu.memory_space<vmem>>, vector<1x128xf32>
    %13 = vector.broadcast %12 : vector<1x128xf32> to vector<8x128xf32>
    %14 = arith.addf %11, %13 : vector<8x128xf32>
    %cst_11 = arith.constant 0.000000e+00 : f32
    %15 = vector.broadcast %cst_11 : f32 to vector<8x128xf32>
    %16 = arith.maximumf %14, %15 : vector<8x128xf32>
    %17 = arith.truncf %16 : vector<8x128xf32> to vector<8x128xbf16>
    %c0_12 = arith.constant 0 : index
    %c0_13 = arith.constant 0 : index
    %18 = vector.load %arg6[%c0_12, %c0_13] : memref<128x128xbf16, #tpu.memory_space<vmem>>, vector<128x128xbf16>
    %cst_14 = arith.constant dense<0.000000e+00> : vector<8x128xf32>
    %19 = tpu.matmul %17, %18, %cst_14 {dimension_numbers = #tpu.dot_dimension_numbers<[1], [0], [0], [1], [0, 0, 1, 1], [], []>} : vector<8x128xbf16>, vector<128x128xbf16>, vector<8x128xf32> -> vector<8x128xf32>
    %c0_15 = arith.constant 0 : index
    %c0_16 = arith.constant 0 : index
    %20 = vector.load %arg7[%c0_15, %c0_16] : memref<1x128xf32, #tpu.memory_space<vmem>>, vector<1x128xf32>
    %21 = vector.broadcast %20 : vector<1x128xf32> to vector<8x128xf32>
    %22 = arith.addf %19, %21 : vector<8x128xf32>
    %cst_17 = arith.constant 0.000000e+00 : f32
    %23 = vector.broadcast %cst_17 : f32 to vector<8x128xf32>
    %24 = arith.maximumf %22, %23 : vector<8x128xf32>
    %25 = arith.truncf %24 : vector<8x128xf32> to vector<8x128xbf16>
    %c0_18 = arith.constant 0 : index
    %c0_19 = arith.constant 0 : index
    %26 = vector.load %arg8[%c0_18, %c0_19] : memref<128x128xbf16, #tpu.memory_space<vmem>>, vector<128x128xbf16>
    %cst_20 = arith.constant dense<0.000000e+00> : vector<8x128xf32>
    %27 = tpu.matmul %25, %26, %cst_20 {dimension_numbers = #tpu.dot_dimension_numbers<[1], [0], [0], [1], [0, 0, 1, 1], [], []>} : vector<8x128xbf16>, vector<128x128xbf16>, vector<8x128xf32> -> vector<8x128xf32>
    %c0_21 = arith.constant 0 : index
    %c0_22 = arith.constant 0 : index
    %28 = vector.load %arg9[%c0_21, %c0_22] : memref<1x128xf32, #tpu.memory_space<vmem>>, vector<1x128xf32>
    %29 = vector.broadcast %28 : vector<1x128xf32> to vector<8x128xf32>
    %30 = arith.addf %27, %29 : vector<8x128xf32>
    %31 = arith.truncf %30 : vector<8x128xf32> to vector<8x128xbf16>
    %c0_23 = arith.constant 0 : index
    %c0_24 = arith.constant 0 : index
    %32 = vector.load %arg10[%c0_23, %c0_24] : memref<8x128xbf16, #tpu.memory_space<vmem>>, vector<8x128xbf16>
    tpu.vector_store %arg10[%c0_23, %c0_24], %31 {strides = array<i32>} : memref<8x128xbf16, #tpu.memory_space<vmem>>, vector<8x128xbf16>,
    return
  }
  func.func @transform_0(%arg0: i32) -> (i32, i32) {
    %c0_i32 = arith.constant 0 : i32
    %c0_i32_0 = arith.constant 0 : i32
    return %arg0, %c0_i32 : i32, i32
  }
  func.func @transform_1(%arg0: i32) -> (i32, i32) {
    %c0_i32 = arith.constant 0 : i32
    %c0_i32_0 = arith.constant 0 : i32
    %c0_i32_1 = arith.constant 0 : i32
    return %c0_i32, %c0_i32_0 : i32, i32
  }
  func.func @transform_2(%arg0: i32) -> (i32, i32) {
    %c0_i32 = arith.constant 0 : i32
    %c0_i32_0 = arith.constant 0 : i32
    %c0_i32_1 = arith.constant 0 : i32
    return %c0_i32, %c0_i32_0 : i32, i32
  }
  func.func @transform_3(%arg0: i32) -> (i32, i32) {
    %c0_i32 = arith.constant 0 : i32
    %c0_i32_0 = arith.constant 0 : i32
    %c0_i32_1 = arith.constant 0 : i32
    return %c0_i32, %c0_i32_0 : i32, i32
  }
  func.func @transform_4(%arg0: i32) -> (i32, i32) {
    %c0_i32 = arith.constant 0 : i32
    %c0_i32_0 = arith.constant 0 : i32
    %c0_i32_1 = arith.constant 0 : i32
    return %c0_i32, %c0_i32_0 : i32, i32
  }
  func.func @transform_5(%arg0: i32) -> (i32, i32) {
    %c0_i32 = arith.constant 0 : i32
    %c0_i32_0 = arith.constant 0 : i32
    %c0_i32_1 = arith.constant 0 : i32
    return %c0_i32, %c0_i32_0 : i32, i32
  }
  func.func @transform_6(%arg0: i32) -> (i32, i32) {
    %c0_i32 = arith.constant 0 : i32
    %c0_i32_0 = arith.constant 0 : i32
    %c0_i32_1 = arith.constant 0 : i32
    return %c0_i32, %c0_i32_0 : i32, i32
  }
  func.func @transform_7(%arg0: i32) -> (i32, i32) {
    %c0_i32 = arith.constant 0 : i32
    %c0_i32_0 = arith.constant 0 : i32
    %c0_i32_1 = arith.constant 0 : i32
    return %c0_i32, %c0_i32_0 : i32, i32
  }
  func.func @transform_8(%arg0: i32) -> (i32, i32) {
    %c0_i32 = arith.constant 0 : i32
    %c0_i32_0 = arith.constant 0 : i32
    %c0_i32_1 = arith.constant 0 : i32
    return %c0_i32, %c0_i32_0 : i32, i32
  }
  func.func @transform_9(%arg0: i32) -> (i32, i32) {
    %c0_i32 = arith.constant 0 : i32
    %c0_i32_0 = arith.constant 0 : i32
    return %arg0, %c0_i32 : i32, i32
  }
}

</mosaic_0001>

<llo_original>
// kernel: mlp_forward.1
$region0: #{mlp_forward.1}
  #allocation0 [shape = 'u32[]', space=smem, size = 0x4, offset = 0x4, fixed_abs, tag = 'smem constant byte address 0x4 - core index']
  #allocation1 [shape = 'u32[144,128]{1,0:T(1,128)}', space=vmem, size = 0x12000, scoped, tag = 'internal scratch']
  %s0 = inlined_call_operand.hbm [shape: f32[8,1200], index: 0, kind: input, shape index: {}]
  %s1 = inlined_call_operand.hbm [shape: bf16[1200,128], index: 1, kind: input, shape index: {}]
  %s2 = inlined_call_operand.vmem [shape: f32[1,128], index: 2, kind: input, shape index: {}]
  %s3 = inlined_call_operand.hbm [shape: bf16[128,128], index: 3, kind: input, shape index: {}]
  %s4 = inlined_call_operand.vmem [shape: f32[1,128], index: 4, kind: input, shape index: {}]
  %s5 = inlined_call_operand.hbm [shape: bf16[128,128], index: 5, kind: input, shape index: {}]
  %s6 = inlined_call_operand.vmem [shape: f32[1,128], index: 6, kind: input, shape index: {}]
  %s7 = inlined_call_operand.hbm [shape: bf16[128,128], index: 7, kind: input, shape index: {}]
  %s8 = inlined_call_operand.vmem [shape: f32[1,128], index: 8, kind: input, shape index: {}]
  %s9 = inlined_call_operand.vmem [shape: bf16[8,128], index: 9, kind: output, shape index: {}]
  %s10 = sld [smem:[#allocation0]]
  $region66: #{mlp_forward.1} parent=0
    _
  %s12 = ssub.s32 1, %s10
  %s13 = scalar_select 0, %s12, %s10
  $region1: #{mlp_forward.1} parent=0
    #allocation2 [shape = 'u8[40960]{0}', space=vmem, size = 0xa000, scoped, tag = 'input window, operand 0, single buffered']
    #allocation3 [shape = 's32[1]{0}', space=sflag, size = 0x4, scoped, tag = 'scoped memory for mlp_forward.1']
    #allocation4 [shape = 'u8[307200]{0}', space=vmem, size = 0x4b000, scoped, tag = 'input window, operand 1, single buffered']
    #allocation5 [shape = 's32[1]{0}', space=sflag, size = 0x4, scoped, tag = 'scoped memory for mlp_forward.1']
    #allocation6 [shape = 'u8[32768]{0}', space=vmem, size = 0x8000, scoped, tag = 'input window, operand 3, single buffered']
    #allocation7 [shape = 'u8[32768]{0}', space=vmem, size = 0x8000, scoped, tag = 'input window, operand 5, single buffered']
    #allocation8 [shape = 's32[1]{0}', space=sflag, size = 0x4, scoped, tag = 'scoped memory for mlp_forward.1']
    #allocation9 [shape = 'u8[32768]{0}', space=vmem, size = 0x8000, scoped, tag = 'input window, operand 7, single buffered']
    %14 = vsyncpa [#allocation3], 0
    %15 = vsyncpa [#allocation5], 0
    %16 = vsyncpa [#allocation8], 0
    // Predicated region
    $region2: #{mlp_forward.1} parent=1 // pred_check
      _
    $region3: #{mlp_forward.1} parent=1 // pred_check_branch
      %18 = sbr.rel (0) target = $region5
    $region4: #{mlp_forward.1} parent=1 // pred_region
      %s20 = ssub.s32 1280, 1280
      %21 = vsyncadd [#allocation3], %s20
      %s23 = sshll.u32 [#allocation2], 4
      %s24 = int_to_ptr.vmem [resolvable:$true] %s23
      %26 = dma.hbm_to_vmem [thread:$0]  %s0, 1280, %s24, [#allocation3]
    $region5: #{mlp_forward.1} parent=1 // pred_fallthru
      _
    // Predicated region
    $region6: #{mlp_forward.1} parent=1 // pred_check
      _
    $region7: #{mlp_forward.1} parent=1 // pred_check_branch
      %28 = sbr.rel (0) target = $region9
    $region8: #{mlp_forward.1} parent=1 // pred_region
      %s30 = ssub.s32 9600, 9600
      %31 = vsyncadd [#allocation5], %s30
      %s32 = sshll.u32 [#allocation4], 4
      %s33 = int_to_ptr.vmem [resolvable:$true] %s32
      %38 = dma.hbm_to_vmem [thread:$0]  %s1, 9600, %s33, [#allocation5], 64, 64, 4
    $region9: #{mlp_forward.1} parent=1 // pred_fallthru
      _
    // Predicated region
    $region10: #{mlp_forward.1} parent=1 // pred_check
      _
    $region11: #{mlp_forward.1} parent=1 // pred_check_branch
      %40 = sbr.rel (0) target = $region13
    $region12: #{mlp_forward.1} parent=1 // pred_region
      _
    $region13: #{mlp_forward.1} parent=1 // pred_fallthru
      _
    // Predicated region
    $region14: #{mlp_forward.1} parent=1 // pred_check
      _
    $region15: #{mlp_forward.1} parent=1 // pred_check_branch
      %42 = sbr.rel (0) target = $region17
    $region16: #{mlp_forward.1} parent=1 // pred_region
      %s44 = ssub.s32 1024, 1024
      %45 = vsyncadd [#allocation5], %s44
      %s46 = sshll.u32 [#allocation6], 4
      %s47 = int_to_ptr.vmem [resolvable:$true] %s46
      %52 = dma.hbm_to_vmem [thread:$0]  %s3, 1024, %s47, [#allocation5], 64, 64, 4
    $region17: #{mlp_forward.1} parent=1 // pred_fallthru
      _
    // Predicated region
    $region18: #{mlp_forward.1} parent=1 // pred_check
      _
    $region19: #{mlp_forward.1} parent=1 // pred_check_branch
      %54 = sbr.rel (0) target = $region21
    $region20: #{mlp_forward.1} parent=1 // pred_region
      _
    $region21: #{mlp_forward.1} parent=1 // pred_fallthru
      _
    // Predicated region
    $region22: #{mlp_forward.1} parent=1 // pred_check
      _
    $region23: #{mlp_forward.1} parent=1 // pred_check_branch
      %56 = sbr.rel (0) target = $region25
    $region24: #{mlp_forward.1} parent=1 // pred_region
      %s58 = ssub.s32 1024, 1024
      %59 = vsyncadd [#allocation8], %s58
      %s60 = sshll.u32 [#allocation7], 4
      %s61 = int_to_ptr.vmem [resolvable:$true] %s60
      %66 = dma.hbm_to_vmem [thread:$0]  %s5, 1024, %s61, [#allocation8], 64, 64, 4
    $region25: #{mlp_forward.1} parent=1 // pred_fallthru
      _
    // Predicated region
    $region26: #{mlp_forward.1} parent=1 // pred_check
      _
    $region27: #{mlp_forward.1} parent=1 // pred_check_branch
      %68 = sbr.rel (0) target = $region29
    $region28: #{mlp_forward.1} parent=1 // pred_region
      _
    $region29: #{mlp_forward.1} parent=1 // pred_fallthru
      _
    // Predicated region
    $region30: #{mlp_forward.1} parent=1 // pred_check
      _
    $region31: #{mlp_forward.1} parent=1 // pred_check_branch
      %70 = sbr.rel (0) target = $region33
    $region32: #{mlp_forward.1} parent=1 // pred_region
      %s72 = ssub.s32 1024, 1024
      %73 = vsyncadd [#allocation8], %s72
      %s74 = sshll.u32 [#allocation9], 4
      %s75 = int_to_ptr.vmem [resolvable:$true] %s74
      %80 = dma.hbm_to_vmem [thread:$0]  %s7, 1024, %s75, [#allocation8], 64, 64, 4
    $region33: #{mlp_forward.1} parent=1 // pred_fallthru
      _
    // Predicated region
    $region34: #{mlp_forward.1} parent=1 // pred_check
      _
    $region35: #{mlp_forward.1} parent=1 // pred_check_branch
      %82 = sbr.rel (0) target = $region37
    $region36: #{mlp_forward.1} parent=1 // pred_region
      _
    $region37: #{mlp_forward.1} parent=1 // pred_fallthru
      _
    // Predicated region
    $region38: #{mlp_forward.1} parent=1 // pred_check
      _
    $region39: #{mlp_forward.1} parent=1 // pred_check_branch
      %84 = sbr.rel (0) target = $region41
    $region40: #{mlp_forward.1} parent=1 // pred_region
      %85 = dma.done [#allocation3], 1280
    $region41: #{mlp_forward.1} parent=1 // pred_fallthru
      _
    // Predicated region
    $region42: #{mlp_forward.1} parent=1 // pred_check
      _
    $region43: #{mlp_forward.1} parent=1 // pred_check_branch
      %87 = sbr.rel (0) target = $region45
    $region44: #{mlp_forward.1} parent=1 // pred_region
      %88 = dma.done [#allocation5], 9600
    $region45: #{mlp_forward.1} parent=1 // pred_fallthru
      _
    // Predicated region
    $region46: #{mlp_forward.1} parent=1 // pred_check
      _
    $region47: #{mlp_forward.1} parent=1 // pred_check_branch
      %90 = sbr.rel (0) target = $region49
    $region48: #{mlp_forward.1} parent=1 // pred_region
      %91 = dma.done [#allocation5], 1024
    $region49: #{mlp_forward.1} parent=1 // pred_fallthru
      _
    // Predicated region
    $region50: #{mlp_forward.1} parent=1 // pred_check
      _
    $region51: #{mlp_forward.1} parent=1 // pred_check_branch
      %93 = sbr.rel (0) target = $region53
    $region52: #{mlp_forward.1} parent=1 // pred_region
      %94 = dma.done [#allocation8], 1024
    $region53: #{mlp_forward.1} parent=1 // pred_fallthru
      _
    // Predicated region
    $region54: #{mlp_forward.1} parent=1 // pred_check
      _
    $region55: #{mlp_forward.1} parent=1 // pred_check_branch
      %96 = sbr.rel (0) target = $region57
    $region56: #{mlp_forward.1} parent=1 // pred_region
      %97 = dma.done [#allocation8], 1024
    $region57: #{mlp_forward.1} parent=1 // pred_fallthru
      _
    %v99 = vld [vmem:[#allocation2] sm:$0xff]
    %v100 = vld [vmem:[#allocation2 + $0x8] sm:$0xff]
    %v101 = vld [vmem:[#allocation2 + $0x10] sm:$0xff]
    %v102 = vld [vmem:[#allocation2 + $0x18] sm:$0xff]
    %v103 = vld [vmem:[#allocation2 + $0x20] sm:$0xff]
    %v104 = vld [vmem:[#allocation2 + $0x28] sm:$0xff]
    %v105 = vld [vmem:[#allocation2 + $0x30] sm:$0xff]
    %v106 = vld [vmem:[#allocation2 + $0x38] sm:$0xff]
    %v107 = vld [vmem:[#allocation2 + $0x40] sm:$0xff]
    %v108 = vld [vmem:[#allocation2 + $0x48] sm:$0xff]
    %v109 = vpack.c.bf16 %v99, %v99
    %v110 = vpack.c.bf16 %v100, %v100
    %v111 = vpack.c.bf16 %v101, %v101
    %v112 = vpack.c.bf16 %v102, %v102
    %v113 = vpack.c.bf16 %v103, %v103
    %v114 = vpack.c.bf16 %v104, %v104
    %v115 = vpack.c.bf16 %v105, %v105
    %v116 = vpack.c.bf16 %v106, %v106
    %v117 = vpack.c.bf16 %v107, %v107
    %v118 = vpack.c.bf16 %v108, %v108
    %v119 = vld [vmem:[#allocation4] sm:$0xf]
    %v120 = vld [vmem:[#allocation4 + $0x4] sm:$0xf]
    %v121 = vld [vmem:[#allocation4 + $0x8] sm:$0xf]
    %v122 = vld [vmem:[#allocation4 + $0xc] sm:$0xf]
    %v123 = vld [vmem:[#allocation4 + $0x10] sm:$0xf]
    %v124 = vld [vmem:[#allocation4 + $0x14] sm:$0xf]
    %v125 = vld [vmem:[#allocation4 + $0x18] sm:$0xf]
    %v126 = vld [vmem:[#allocation4 + $0x1c] sm:$0xf]
    %v127 = vld [vmem:[#allocation4 + $0x20] sm:$0xf]
    %v128 = vld [vmem:[#allocation4 + $0x24] sm:$0xf]
    %v129 = vld [vmem:[#allocation4 + $0x28] sm:$0xf]
    %v130 = vld [vmem:[#allocation4 + $0x2c] sm:$0xf]
    %v131 = vld [vmem:[#allocation4 + $0x30] sm:$0xf]
    %v132 = vld [vmem:[#allocation4 + $0x34] sm:$0xf]
    %v133 = vld [vmem:[#allocation4 + $0x38] sm:$0xf]
    %v134 = vld [vmem:[#allocation4 + $0x3c] sm:$0xf]
    %v135 = vld [vmem:[#allocation4 + $0x40] sm:$0xf]
    %v136 = vld [vmem:[#allocation4 + $0x44] sm:$0xf]
    %v137 = vld [vmem:[#allocation4 + $0x48] sm:$0xf]
    %v138 = vld [vmem:[#allocation4 + $0x4c] sm:$0xf]
    %v139 = vld [vmem:[#allocation4 + $0x50] sm:$0xf]
    %v140 = vld [vmem:[#allocation4 + $0x54] sm:$0xf]
    %v141 = vld [vmem:[#allocation4 + $0x58] sm:$0xf]
    %v142 = vld [vmem:[#allocation4 + $0x5c] sm:$0xf]
    %v143 = vld [vmem:[#allocation4 + $0x60] sm:$0xf]
    %v144 = vld [vmem:[#allocation4 + $0x64] sm:$0xf]
    %v145 = vld [vmem:[#allocation4 + $0x68] sm:$0xf]
    %v146 = vld [vmem:[#allocation4 + $0x6c] sm:$0xf]
    %v147 = vld [vmem:[#allocation4 + $0x70] sm:$0xf]
    %v148 = vld [vmem:[#allocation4 + $0x74] sm:$0xf]
    %v149 = vld [vmem:[#allocation4 + $0x78] sm:$0xf]
    %v150 = vld [vmem:[#allocation4 + $0x7c] sm:$0xf]
    %v151 = vld [vmem:[#allocation4 + $0x80] sm:$0xf]
    %v152 = vld [vmem:[#allocation4 + $0x84] sm:$0xf]
    %v153 = vld [vmem:[#allocation4 + $0x88] sm:$0xf]
    %v154 = vld [vmem:[#allocation4 + $0x8c] sm:$0xf]
    %v155 = vld [vmem:[#allocation4 + $0x90] sm:$0xf]
    %v156 = vld [vmem:[#allocation4 + $0x94] sm:$0xf]
    %v157 = vld [vmem:[#allocation4 + $0x98] sm:$0xf]
    %v158 = vld [vmem:[#allocation4 + $0x9c] sm:$0xf]
    %v159 = vld [vmem:[#allocation4 + $0xa0] sm:$0xf]
    %v160 = vld [vmem:[#allocation4 + $0xa4] sm:$0xf]
    %v161 = vld [vmem:[#allocation4 + $0xa8] sm:$0xf]
    %v162 = vld [vmem:[#allocation4 + $0xac] sm:$0xf]
    %v163 = vld [vmem:[#allocation4 + $0xb0] sm:$0xf]
    %v164 = vld [vmem:[#allocation4 + $0xb4] sm:$0xf]
    %v165 = vld [vmem:[#allocation4 + $0xb8] sm:$0xf]
    %v166 = vld [vmem:[#allocation4 + $0xbc] sm:$0xf]
    %v167 = vld [vmem:[#allocation4 + $0xc0] sm:$0xf]
    %v168 = vld [vmem:[#allocation4 + $0xc4] sm:$0xf]
    %v169 = vld [vmem:[#allocation4 + $0xc8] sm:$0xf]
    %v170 = vld [vmem:[#allocation4 + $0xcc] sm:$0xf]
    %v171 = vld [vmem:[#allocation4 + $0xd0] sm:$0xf]
    %v172 = vld [vmem:[#allocation4 + $0xd4] sm:$0xf]
    %v173 = vld [vmem:[#allocation4 + $0xd8] sm:$0xf]
    %v174 = vld [vmem:[#allocation4 + $0xdc] sm:$0xf]
    %v175 = vld [vmem:[#allocation4 + $0xe0] sm:$0xf]
    %v176 = vld [vmem:[#allocation4 + $0xe4] sm:$0xf]
    %v177 = vld [vmem:[#allocation4 + $0xe8] sm:$0xf]
    %v178 = vld [vmem:[#allocation4 + $0xec] sm:$0xf]
    %v179 = vld [vmem:[#allocation4 + $0xf0] sm:$0xf]
    %v180 = vld [vmem:[#allocation4 + $0xf4] sm:$0xf]
    %v181 = vld [vmem:[#allocation4 + $0xf8] sm:$0xf]
    %v182 = vld [vmem:[#allocation4 + $0xfc] sm:$0xf]
    %v183 = vld [vmem:[#allocation4 + $0x100] sm:$0xf]
    %v184 = vld [vmem:[#allocation4 + $0x104] sm:$0xf]
    %v185 = vld [vmem:[#allocation4 + $0x108] sm:$0xf]
    %v186 = vld [vmem:[#allocation4 + $0x10c] sm:$0xf]
    %v187 = vld [vmem:[#allocation4 + $0x110] sm:$0xf]
    %v188 = vld [vmem:[#allocation4 + $0x114] sm:$0xf]
    %v189 = vld [vmem:[#allocation4 + $0x118] sm:$0xf]
    %v190 = vld [vmem:[#allocation4 + $0x11c] sm:$0xf]
    %v191 = vld [vmem:[#allocation4 + $0x120] sm:$0xf]
    %v192 = vld [vmem:[#allocation4 + $0x124] sm:$0xf]
    %v193 = vld [vmem:[#allocation4 + $0x128] sm:$0xf]
    %v194 = vld [vmem:[#allocation4 + $0x12c] sm:$0xf]
    %v195 = vld [vmem:[#allocation4 + $0x130] sm:$0xf]
    %v196 = vld [vmem:[#allocation4 + $0x134] sm:$0xf]
    %v197 = vld [vmem:[#allocation4 + $0x138] sm:$0xf]
    %v198 = vld [vmem:[#allocation4 + $0x13c] sm:$0xf]
    %v199 = vld [vmem:[#allocation4 + $0x140] sm:$0xf]
    %v200 = vld [vmem:[#allocation4 + $0x144] sm:$0xf]
    %v201 = vld [vmem:[#allocation4 + $0x148] sm:$0xf]
    %v202 = vld [vmem:[#allocation4 + $0x14c] sm:$0xf]
    %v203 = vld [vmem:[#allocation4 + $0x150] sm:$0xf]
    %v204 = vld [vmem:[#allocation4 + $0x154] sm:$0xf]
    %v205 = vld [vmem:[#allocation4 + $0x158] sm:$0xf]
    %v206 = vld [vmem:[#allocation4 + $0x15c] sm:$0xf]
    %v207 = vld [vmem:[#allocation4 + $0x160] sm:$0xf]
    %v208 = vld [vmem:[#allocation4 + $0x164] sm:$0xf]
    %v209 = vld [vmem:[#allocation4 + $0x168] sm:$0xf]
    %v210 = vld [vmem:[#allocation4 + $0x16c] sm:$0xf]
    %v211 = vld [vmem:[#allocation4 + $0x170] sm:$0xf]
    %v212 = vld [vmem:[#allocation4 + $0x174] sm:$0xf]
    %v213 = vld [vmem:[#allocation4 + $0x178] sm:$0xf]
    %v214 = vld [vmem:[#allocation4 + $0x17c] sm:$0xf]
    %v215 = vld [vmem:[#allocation4 + $0x180] sm:$0xf]
    %v216 = vld [vmem:[#allocation4 + $0x184] sm:$0xf]
    %v217 = vld [vmem:[#allocation4 + $0x188] sm:$0xf]
    %v218 = vld [vmem:[#allocation4 + $0x18c] sm:$0xf]
    %v219 = vld [vmem:[#allocation4 + $0x190] sm:$0xf]
    %v220 = vld [vmem:[#allocation4 + $0x194] sm:$0xf]
    %v221 = vld [vmem:[#allocation4 + $0x198] sm:$0xf]
    %v222 = vld [vmem:[#allocation4 + $0x19c] sm:$0xf]
    %v223 = vld [vmem:[#allocation4 + $0x1a0] sm:$0xf]
    %v224 = vld [vmem:[#allocation4 + $0x1a4] sm:$0xf]
    %v225 = vld [vmem:[#allocation4 + $0x1a8] sm:$0xf]
    %v226 = vld [vmem:[#allocation4 + $0x1ac] sm:$0xf]
    %v227 = vld [vmem:[#allocation4 + $0x1b0] sm:$0xf]
    %v228 = vld [vmem:[#allocation4 + $0x1b4] sm:$0xf]
    %v229 = vld [vmem:[#allocation4 + $0x1b8] sm:$0xf]
    %v230 = vld [vmem:[#allocation4 + $0x1bc] sm:$0xf]
    %v231 = vld [vmem:[#allocation4 + $0x1c0] sm:$0xf]
    %v232 = vld [vmem:[#allocation4 + $0x1c4] sm:$0xf]
    %v233 = vld [vmem:[#allocation4 + $0x1c8] sm:$0xf]
    %v234 = vld [vmem:[#allocation4 + $0x1cc] sm:$0xf]
    %v235 = vld [vmem:[#allocation4 + $0x1d0] sm:$0xf]
    %v236 = vld [vmem:[#allocation4 + $0x1d4] sm:$0xf]
    %v237 = vld [vmem:[#allocation4 + $0x1d8] sm:$0xf]
    %v238 = vld [vmem:[#allocation4 + $0x1dc] sm:$0xf]
    %v239 = vld [vmem:[#allocation4 + $0x1e0] sm:$0xf]
    %v240 = vld [vmem:[#allocation4 + $0x1e4] sm:$0xf]
    %v241 = vld [vmem:[#allocation4 + $0x1e8] sm:$0xf]
    %v242 = vld [vmem:[#allocation4 + $0x1ec] sm:$0xf]
    %v243 = vld [vmem:[#allocation4 + $0x1f0] sm:$0xf]
    %v244 = vld [vmem:[#allocation4 + $0x1f4] sm:$0xf]
    %v245 = vld [vmem:[#allocation4 + $0x1f8] sm:$0xf]
    %v246 = vld [vmem:[#allocation4 + $0x1fc] sm:$0xf]
    %v247 = vld [vmem:[#allocation4 + $0x200] sm:$0xf]
    %v248 = vld [vmem:[#allocation4 + $0x204] sm:$0xf]
    %v249 = vld [vmem:[#allocation4 + $0x208] sm:$0xf]
    %v250 = vld [vmem:[#allocation4 + $0x20c] sm:$0xf]
    %v251 = vld [vmem:[#allocation4 + $0x210] sm:$0xf]
    %v252 = vld [vmem:[#allocation4 + $0x214] sm:$0xf]
    %v253 = vld [vmem:[#allocation4 + $0x218] sm:$0xf]
    %v254 = vld [vmem:[#allocation4 + $0x21c] sm:$0xf]
    %v255 = vld [vmem:[#allocation4 + $0x220] sm:$0xf]
    %v256 = vld [vmem:[#allocation4 + $0x224] sm:$0xf]
    %v257 = vld [vmem:[#allocation4 + $0x228] sm:$0xf]
    %v258 = vld [vmem:[#allocation4 + $0x22c] sm:$0xf]
    %v259 = vld [vmem:[#allocation4 + $0x230] sm:$0xf]
    %v260 = vld [vmem:[#allocation4 + $0x234] sm:$0xf]
    %v261 = vld [vmem:[#allocation4 + $0x238] sm:$0xf]
    %v262 = vld [vmem:[#allocation4 + $0x23c] sm:$0xf]
    %v263 = vld [vmem:[#allocation4 + $0x240] sm:$0xf]
    %v264 = vld [vmem:[#allocation4 + $0x244] sm:$0xf]
    %v265 = vld [vmem:[#allocation4 + $0x248] sm:$0xf]
    %v266 = vld [vmem:[#allocation4 + $0x24c] sm:$0xf]
    %v267 = vld [vmem:[#allocation4 + $0x250] sm:$0xf]
    %v268 = vld [vmem:[#allocation4 + $0x254] sm:$0xf]
    %v269 = vld [vmem:[%s2] sm:$0x1]
    %v271 = vlaneseq
    %v272 = vshrl.u32 %v271, 7
    %v273 = vsub.s32 0, %v272
    %v274 = vrot.slane %v269, %v273
    %v426 = vunpack.c.l.b16 %v119
    %v427 = vunpack.c.l.b16 %v120
    %v428 = vunpack.c.l.b16 %v121
    %v429 = vunpack.c.l.b16 %v122
    %v430 = vunpack.c.l.b16 %v123
    %v431 = vunpack.c.l.b16 %v124
    %v432 = vunpack.c.l.b16 %v125
    %v433 = vunpack.c.l.b16 %v126
    %v434 = vunpack.c.l.b16 %v127
    %v435 = vunpack.c.l.b16 %v128
    %v436 = vunpack.c.l.b16 %v129
    %v437 = vunpack.c.l.b16 %v130
    %v438 = vunpack.c.l.b16 %v131
    %v439 = vunpack.c.l.b16 %v132
    %v440 = vunpack.c.l.b16 %v133
    %v441 = vunpack.c.l.b16 %v134
    %v442 = vunpack.c.l.b16 %v135
    %v443 = vunpack.c.l.b16 %v136
    %v444 = vunpack.c.l.b16 %v137
    %v445 = vunpack.c.l.b16 %v138
    %v446 = vunpack.c.l.b16 %v139
    %v447 = vunpack.c.l.b16 %v140
    %v448 = vunpack.c.l.b16 %v141
    %v449 = vunpack.c.l.b16 %v142
    %v450 = vunpack.c.l.b16 %v143
    %v451 = vunpack.c.l.b16 %v144
    %v452 = vunpack.c.l.b16 %v145
    %v453 = vunpack.c.l.b16 %v146
    %v454 = vunpack.c.l.b16 %v147
    %v455 = vunpack.c.l.b16 %v148
    %v456 = vunpack.c.l.b16 %v149
    %v457 = vunpack.c.l.b16 %v150
    %v458 = vunpack.c.l.b16 %v151
    %v459 = vunpack.c.l.b16 %v152
    %v460 = vunpack.c.l.b16 %v153
    %v461 = vunpack.c.l.b16 %v154
    %v462 = vunpack.c.l.b16 %v155
    %v463 = vunpack.c.l.b16 %v156
    %v464 = vunpack.c.l.b16 %v157
    %v465 = vunpack.c.l.b16 %v158
    %v466 = vunpack.c.l.b16 %v159
    %v467 = vunpack.c.l.b16 %v160
    %v468 = vunpack.c.l.b16 %v161
    %v469 = vunpack.c.l.b16 %v162
    %v470 = vunpack.c.l.b16 %v163
    %v471 = vunpack.c.l.b16 %v164
    %v472 = vunpack.c.l.b16 %v165
    %v473 = vunpack.c.l.b16 %v166
    %v474 = vunpack.c.l.b16 %v167
    %v475 = vunpack.c.l.b16 %v168
    %v476 = vunpack.c.l.b16 %v169
    %v477 = vunpack.c.l.b16 %v170
    %v478 = vunpack.c.l.b16 %v171
    %v479 = vunpack.c.l.b16 %v172
    %v480 = vunpack.c.l.b16 %v173
    %v481 = vunpack.c.l.b16 %v174
    %v482 = vunpack.c.l.b16 %v175
    %v483 = vunpack.c.l.b16 %v176
    %v484 = vunpack.c.l.b16 %v177
    %v485 = vunpack.c.l.b16 %v178
    %v486 = vunpack.c.l.b16 %v179
    %v487 = vunpack.c.l.b16 %v180
    %v488 = vunpack.c.l.b16 %v181
    %v489 = vunpack.c.l.b16 %v182
    %v490 = vunpack.c.l.b16 %v183
    %v491 = vunpack.c.l.b16 %v184
    %v492 = vunpack.c.l.b16 %v185
    %v493 = vunpack.c.l.b16 %v186
    %v494 = vunpack.c.l.b16 %v187
    %v495 = vunpack.c.l.b16 %v188
    %v496 = vunpack.c.l.b16 %v189
    %v497 = vunpack.c.l.b16 %v190
    %v498 = vunpack.c.l.b16 %v191
    %v499 = vunpack.c.l.b16 %v192
    %v500 = vunpack.c.l.b16 %v193
    %v501 = vunpack.c.l.b16 %v194
    %v502 = vunpack.c.l.b16 %v195
    %v503 = vunpack.c.l.b16 %v196
    %v504 = vunpack.c.l.b16 %v197
    %v505 = vunpack.c.l.b16 %v198
    %v506 = vunpack.c.l.b16 %v199
    %v507 = vunpack.c.l.b16 %v200
    %v508 = vunpack.c.l.b16 %v201
    %v509 = vunpack.c.l.b16 %v202
    %v510 = vunpack.c.l.b16 %v203
    %v511 = vunpack.c.l.b16 %v204
    %v512 = vunpack.c.l.b16 %v205
    %v513 = vunpack.c.l.b16 %v206
    %v514 = vunpack.c.l.b16 %v207
    %v515 = vunpack.c.l.b16 %v208
    %v516 = vunpack.c.l.b16 %v209
    %v517 = vunpack.c.l.b16 %v210
    %v518 = vunpack.c.l.b16 %v211
    %v519 = vunpack.c.l.b16 %v212
    %v520 = vunpack.c.l.b16 %v213
    %v521 = vunpack.c.l.b16 %v214
    %v522 = vunpack.c.l.b16 %v215
    %v523 = vunpack.c.l.b16 %v216
    %v524 = vunpack.c.l.b16 %v217
    %v525 = vunpack.c.l.b16 %v218
    %v526 = vunpack.c.l.b16 %v219
    %v527 = vunpack.c.l.b16 %v220
    %v528 = vunpack.c.l.b16 %v221
    %v529 = vunpack.c.l.b16 %v222
    %v530 = vunpack.c.l.b16 %v223
    %v531 = vunpack.c.l.b16 %v224
    %v532 = vunpack.c.l.b16 %v225
    %v533 = vunpack.c.l.b16 %v226
    %v534 = vunpack.c.l.b16 %v227
    %v535 = vunpack.c.l.b16 %v228
    %v536 = vunpack.c.l.b16 %v229
    %v537 = vunpack.c.l.b16 %v230
    %v538 = vunpack.c.l.b16 %v231
    %v539 = vunpack.c.l.b16 %v232
    %v540 = vunpack.c.l.b16 %v233
    %v541 = vunpack.c.l.b16 %v234
    %v542 = vunpack.c.l.b16 %v235
    %v543 = vunpack.c.l.b16 %v236
    %v544 = vunpack.c.l.b16 %v237
    %v545 = vunpack.c.l.b16 %v238
    %v546 = vunpack.c.l.b16 %v239
    %v547 = vunpack.c.l.b16 %v240
    %v548 = vunpack.c.l.b16 %v241
    %v549 = vunpack.c.l.b16 %v242
    %v550 = vunpack.c.l.b16 %v243
    %v551 = vunpack.c.l.b16 %v244
    %v552 = vunpack.c.l.b16 %v245
    %v553 = vunpack.c.l.b16 %v246
    %v554 = vunpack.c.l.b16 %v247
    %v555 = vunpack.c.l.b16 %v248
    %v556 = vunpack.c.l.b16 %v249
    %v557 = vunpack.c.l.b16 %v250
    %v558 = vunpack.c.l.b16 %v251
    %v559 = vunpack.c.l.b16 %v252
    %v560 = vunpack.c.l.b16 %v253
    %v561 = vunpack.c.l.b16 %v254
    %v562 = vunpack.c.l.b16 %v255
    %v563 = vunpack.c.l.b16 %v256
    %v564 = vunpack.c.l.b16 %v257
    %v565 = vunpack.c.l.b16 %v258
    %v566 = vunpack.c.l.b16 %v259
    %v567 = vunpack.c.l.b16 %v260
    %v568 = vunpack.c.l.b16 %v261
    %v569 = vunpack.c.l.b16 %v262
    %v570 = vunpack.c.l.b16 %v263
    %v571 = vunpack.c.l.b16 %v264
    %v572 = vunpack.c.l.b16 %v265
    %v573 = vunpack.c.l.b16 %v266
    %v574 = vunpack.c.l.b16 %v267
    %v575 = vunpack.c.l.b16 %v268
    %v576 = vpack.c.b16 %v427, %v426
    %v577 = vpack.c.b16 %v429, %v428
    %v578 = vpack.c.b16 %v431, %v430
    %v579 = vpack.c.b16 %v433, %v432
    %v580 = vpack.c.b16 %v435, %v434
    %v581 = vpack.c.b16 %v437, %v436
    %v582 = vpack.c.b16 %v439, %v438
    %v583 = vpack.c.b16 %v441, %v440
    %v584 = vpack.c.b16 %v443, %v442
    %v585 = vpack.c.b16 %v445, %v444
    %v586 = vpack.c.b16 %v447, %v446
    %v587 = vpack.c.b16 %v449, %v448
    %v588 = vpack.c.b16 %v451, %v450
    %v589 = vpack.c.b16 %v453, %v452
    %v590 = vpack.c.b16 %v455, %v454
    %v591 = vpack.c.b16 %v457, %v456
    %v592 = vpack.c.b16 %v459, %v458
    %v593 = vpack.c.b16 %v461, %v460
    %v594 = vpack.c.b16 %v463, %v462
    %v595 = vpack.c.b16 %v465, %v464
    %v596 = vpack.c.b16 %v467, %v466
    %v597 = vpack.c.b16 %v469, %v468
    %v598 = vpack.c.b16 %v471, %v470
    %v599 = vpack.c.b16 %v473, %v472
    %v600 = vpack.c.b16 %v475, %v474
    %v601 = vpack.c.b16 %v477, %v476
    %v602 = vpack.c.b16 %v479, %v478
    %v603 = vpack.c.b16 %v481, %v480
    %v604 = vpack.c.b16 %v483, %v482
    %v605 = vpack.c.b16 %v485, %v484
    %v606 = vpack.c.b16 %v487, %v486
    %v607 = vpack.c.b16 %v489, %v488
    %v608 = vpack.c.b16 %v491, %v490
    %v609 = vpack.c.b16 %v493, %v492
    %v610 = vpack.c.b16 %v495, %v494
    %v611 = vpack.c.b16 %v497, %v496
    %v612 = vpack.c.b16 %v499, %v498
    %v613 = vpack.c.b16 %v501, %v500
    %v614 = vpack.c.b16 %v503, %v502
    %v615 = vpack.c.b16 %v505, %v504
    %v616 = vpack.c.b16 %v507, %v506
    %v617 = vpack.c.b16 %v509, %v508
    %v618 = vpack.c.b16 %v511, %v510
    %v619 = vpack.c.b16 %v513, %v512
    %v620 = vpack.c.b16 %v515, %v514
    %v621 = vpack.c.b16 %v517, %v516
    %v622 = vpack.c.b16 %v519, %v518
    %v623 = vpack.c.b16 %v521, %v520
    %v624 = vpack.c.b16 %v523, %v522
    %v625 = vpack.c.b16 %v525, %v524
    %v626 = vpack.c.b16 %v527, %v526
    %v627 = vpack.c.b16 %v529, %v528
    %v628 = vpack.c.b16 %v531, %v530
    %v629 = vpack.c.b16 %v533, %v532
    %v630 = vpack.c.b16 %v535, %v534
    %v631 = vpack.c.b16 %v537, %v536
    %v632 = vpack.c.b16 %v539, %v538
    %v633 = vpack.c.b16 %v541, %v540
    %v634 = vpack.c.b16 %v543, %v542
    %v635 = vpack.c.b16 %v545, %v544
    %v636 = vpack.c.b16 %v547, %v546
    %v637 = vpack.c.b16 %v549, %v548
    %v638 = vpack.c.b16 %v551, %v550
    %v639 = vpack.c.b16 %v553, %v552
    %v640 = vpack.c.b16 %v555, %v554
    %v641 = vpack.c.b16 %v557, %v556
    %v642 = vpack.c.b16 %v559, %v558
    %v643 = vpack.c.b16 %v561, %v560
    %v644 = vpack.c.b16 %v563, %v562
    %v645 = vpack.c.b16 %v565, %v564
    %v646 = vpack.c.b16 %v567, %v566
    %v647 = vpack.c.b16 %v569, %v568
    %v648 = vpack.c.b16 %v571, %v570
    %v649 = vpack.c.b16 %v573, %v572
    %v650 = vpack.c.b16 %v575, %v574
    %vm726 = vcmask 392192
    %v728 = vsel %vm726, %v118, 0
    %730 = vmatprep.subr.bf16.mxu0 0
    %731 = vmatpush1.bf16.msra.mxu0 %v583
    %732 = vmatprep.subr.bf16.mxu0 0
    %733 = vmatpush1.bf16.msra.mxu0 %v582
    %734 = vmatprep.subr.bf16.mxu0 0
    %735 = vmatpush1.bf16.msra.mxu0 %v581
    %736 = vmatprep.subr.bf16.mxu0 0
    %737 = vmatpush1.bf16.msra.mxu0 %v580
    %738 = vmatprep.subr.bf16.mxu0 0
    %739 = vmatpush1.bf16.msra.mxu0 %v579
    %740 = vmatprep.subr.bf16.mxu0 0
    %741 = vmatpush1.bf16.msra.mxu0 %v578
    %742 = vmatprep.subr.bf16.mxu0 0
    %743 = vmatpush1.bf16.msra.mxu0 %v577
    %744 = vmatprep.subr.bf16.mxu0 0
    %745 = vmatpush1.bf16.msra.mxu0 %v576
    %746 = vmatprep.subr.bf16.mxu0 0
    %747 = vmatpush2.bf16.msra.mxu0 %v591
    %748 = vmatprep.subr.bf16.mxu0 0
    %749 = vmatpush2.bf16.msra.mxu0 %v590
    %750 = vmatprep.subr.bf16.mxu0 0
    %751 = vmatpush2.bf16.msra.mxu0 %v589
    %752 = vmatprep.subr.bf16.mxu0 0
    %753 = vmatpush2.bf16.msra.mxu0 %v588
    %754 = vmatprep.subr.bf16.mxu0 0
    %755 = vmatpush2.bf16.msra.mxu0 %v587
    %756 = vmatprep.subr.bf16.mxu0 0
    %757 = vmatpush2.bf16.msra.mxu0 %v586
    %758 = vmatprep.subr.bf16.mxu0 0
    %759 = vmatpush2.bf16.msra.mxu0 %v585
    %760 = vmatprep.subr.bf16.mxu0 0
    %761 = vmatpush2.bf16.msra.mxu0 %v584
    %762 = vmatprep.mubr.bf16.mxu0 %v110
    %763 = vmatmul.mubr.bf16.gmra.mxu0 %v109
    %v764 = vpop.f32.mrf.mxu0
    %v765 = vadd.f32 %v274, %v764
    %v766 = vpop.f32.mrf.mxu0
    %v767 = vpop.f32.mrf.mxu0
    %v768 = vpop.f32.mrf.mxu0
    %769 = vdwg.mxu0
    %770 = vmatprep.subr.bf16.mxu0 0
    %771 = vmatpush1.bf16.msra.mxu0 %v599
    %772 = vmatprep.subr.bf16.mxu0 0
    %773 = vmatpush1.bf16.msra.mxu0 %v598
    %774 = vmatprep.subr.bf16.mxu0 0
    %775 = vmatpush1.bf16.msra.mxu0 %v597
    %776 = vmatprep.subr.bf16.mxu0 0
    %777 = vmatpush1.bf16.msra.mxu0 %v596
    %778 = vmatprep.subr.bf16.mxu0 0
    %779 = vmatpush1.bf16.msra.mxu0 %v595
    %780 = vmatprep.subr.bf16.mxu0 0
    %781 = vmatpush1.bf16.msra.mxu0 %v594
    %782 = vmatprep.subr.bf16.mxu0 0
    %783 = vmatpush1.bf16.msra.mxu0 %v593
    %784 = vmatprep.subr.bf16.mxu0 0
    %785 = vmatpush1.bf16.msra.mxu0 %v592
    %786 = vmatprep.subr.bf16.mxu0 0
    %787 = vmatpush2.bf16.msra.mxu0 %v607
    %788 = vmatprep.subr.bf16.mxu0 0
    %789 = vmatpush2.bf16.msra.mxu0 %v606
    %790 = vmatprep.subr.bf16.mxu0 0
    %791 = vmatpush2.bf16.msra.mxu0 %v605
    %792 = vmatprep.subr.bf16.mxu0 0
    %793 = vmatpush2.bf16.msra.mxu0 %v604
    %794 = vmatprep.subr.bf16.mxu0 0
    %795 = vmatpush2.bf16.msra.mxu0 %v603
    %796 = vmatprep.subr.bf16.mxu0 0
    %797 = vmatpush2.bf16.msra.mxu0 %v602
    %798 = vmatprep.subr.bf16.mxu0 0
    %799 = vmatpush2.bf16.msra.mxu0 %v601
    %800 = vmatprep.subr.bf16.mxu0 0
    %801 = vmatpush2.bf16.msra.mxu0 %v600
    %802 = vmatprep.mubr.bf16.mxu0 %v112
    %803 = vmatmul.mubr.bf16.gmra.mxu0 %v111
    %v804 = vpop.f32.mrf.mxu0
    %v805 = vadd.f32 %v765, %v804
    %v806 = vpop.f32.mrf.mxu0
    %v807 = vpop.f32.mrf.mxu0
    %v808 = vpop.f32.mrf.mxu0
    %809 = vdwg.mxu0
    %810 = vmatprep.subr.bf16.mxu0 0
    %811 = vmatpush1.bf16.msra.mxu0 %v615
    %812 = vmatprep.subr.bf16.mxu0 0
    %813 = vmatpush1.bf16.msra.mxu0 %v614
    %814 = vmatprep.subr.bf16.mxu0 0
    %815 = vmatpush1.bf16.msra.mxu0 %v613
    %816 = vmatprep.subr.bf16.mxu0 0
    %817 = vmatpush1.bf16.msra.mxu0 %v612
    %818 = vmatprep.subr.bf16.mxu0 0
    %819 = vmatpush1.bf16.msra.mxu0 %v611
    %820 = vmatprep.subr.bf16.mxu0 0
    %821 = vmatpush1.bf16.msra.mxu0 %v610
    %822 = vmatprep.subr.bf16.mxu0 0
    %823 = vmatpush1.bf16.msra.mxu0 %v609
    %824 = vmatprep.subr.bf16.mxu0 0
    %825 = vmatpush1.bf16.msra.mxu0 %v608
    %826 = vmatprep.subr.bf16.mxu0 0
    %827 = vmatpush2.bf16.msra.mxu0 %v623
    %828 = vmatprep.subr.bf16.mxu0 0
    %829 = vmatpush2.bf16.msra.mxu0 %v622
    %830 = vmatprep.subr.bf16.mxu0 0
    %831 = vmatpush2.bf16.msra.mxu0 %v621
    %832 = vmatprep.subr.bf16.mxu0 0
    %833 = vmatpush2.bf16.msra.mxu0 %v620
    %834 = vmatprep.subr.bf16.mxu0 0
    %835 = vmatpush2.bf16.msra.mxu0 %v619
    %836 = vmatprep.subr.bf16.mxu0 0
    %837 = vmatpush2.bf16.msra.mxu0 %v618
    %838 = vmatprep.subr.bf16.mxu0 0
    %839 = vmatpush2.bf16.msra.mxu0 %v617
    %840 = vmatprep.subr.bf16.mxu0 0
    %841 = vmatpush2.bf16.msra.mxu0 %v616
    %842 = vmatprep.mubr.bf16.mxu0 %v114
    %843 = vmatmul.mubr.bf16.gmra.mxu0 %v113
    %v844 = vpop.f32.mrf.mxu0
    %v845 = vadd.f32 %v805, %v844
    %v846 = vpop.f32.mrf.mxu0
    %v847 = vpop.f32.mrf.mxu0
    %v848 = vpop.f32.mrf.mxu0
    %849 = vdwg.mxu0
    %850 = vmatprep.subr.bf16.mxu0 0
    %851 = vmatpush1.bf16.msra.mxu0 %v631
    %852 = vmatprep.subr.bf16.mxu0 0
    %853 = vmatpush1.bf16.msra.mxu0 %v630
    %854 = vmatprep.subr.bf16.mxu0 0
    %855 = vmatpush1.bf16.msra.mxu0 %v629
    %856 = vmatprep.subr.bf16.mxu0 0
    %857 = vmatpush1.bf16.msra.mxu0 %v628
    %858 = vmatprep.subr.bf16.mxu0 0
    %859 = vmatpush1.bf16.msra.mxu0 %v627
    %860 = vmatprep.subr.bf16.mxu0 0
    %861 = vmatpush1.bf16.msra.mxu0 %v626
    %862 = vmatprep.subr.bf16.mxu0 0
    %863 = vmatpush1.bf16.msra.mxu0 %v625
    %864 = vmatprep.subr.bf16.mxu0 0
    %865 = vmatpush1.bf16.msra.mxu0 %v624
    %866 = vmatprep.subr.bf16.mxu0 0
    %867 = vmatpush2.bf16.msra.mxu0 %v639
    %868 = vmatprep.subr.bf16.mxu0 0
    %869 = vmatpush2.bf16.msra.mxu0 %v638
    %870 = vmatprep.subr.bf16.mxu0 0
    %871 = vmatpush2.bf16.msra.mxu0 %v637
    %872 = vmatprep.subr.bf16.mxu0 0
    %873 = vmatpush2.bf16.msra.mxu0 %v636
    %874 = vmatprep.subr.bf16.mxu0 0
    %875 = vmatpush2.bf16.msra.mxu0 %v635
    %876 = vmatprep.subr.bf16.mxu0 0
    %877 = vmatpush2.bf16.msra.mxu0 %v634
    %878 = vmatprep.subr.bf16.mxu0 0
    %879 = vmatpush2.bf16.msra.mxu0 %v633
    %880 = vmatprep.subr.bf16.mxu0 0
    %881 = vmatpush2.bf16.msra.mxu0 %v632
    %882 = vmatprep.mubr.bf16.mxu0 %v116
    %883 = vmatmul.mubr.bf16.gmra.mxu0 %v115
    %v884 = vpop.f32.mrf.mxu0
    %v885 = vadd.f32 %v845, %v884
    %v886 = vpop.f32.mrf.mxu0
    %v887 = vpop.f32.mrf.mxu0
    %v888 = vpop.f32.mrf.mxu0
    %889 = vdwg.mxu0
    %890 = vmatprep.subr.bf16.mxu0 0
    %891 = vmatpush1.bf16.msra.mxu0 %v647
    %892 = vmatprep.subr.bf16.mxu0 0
    %893 = vmatpush1.bf16.msra.mxu0 %v646
    %894 = vmatprep.subr.bf16.mxu0 0
    %895 = vmatpush1.bf16.msra.mxu0 %v645
    %896 = vmatprep.subr.bf16.mxu0 0
    %897 = vmatpush1.bf16.msra.mxu0 %v644
    %898 = vmatprep.subr.bf16.mxu0 0
    %899 = vmatpush1.bf16.msra.mxu0 %v643
    %900 = vmatprep.subr.bf16.mxu0 0
    %901 = vmatpush1.bf16.msra.mxu0 %v642
    %902 = vmatprep.subr.bf16.mxu0 0
    %903 = vmatpush1.bf16.msra.mxu0 %v641
    %904 = vmatprep.subr.bf16.mxu0 0
    %905 = vmatpush1.bf16.msra.mxu0 %v640
    %906 = vmatprep.subr.bf16.mxu0 0
    %907 = vmatpush2.bf16.msra.mxu0 0
    %908 = vmatprep.subr.bf16.mxu0 0
    %909 = vmatpush2.bf16.msra.mxu0 0
    %910 = vmatprep.subr.bf16.mxu0 0
    %911 = vmatpush2.bf16.msra.mxu0 0
    %912 = vmatprep.subr.bf16.mxu0 0
    %913 = vmatpush2.bf16.msra.mxu0 0
    %914 = vmatprep.subr.bf16.mxu0 0
    %915 = vmatpush2.bf16.msra.mxu0 0
    %916 = vmatprep.subr.bf16.mxu0 0
    %917 = vmatpush2.bf16.msra.mxu0 %v650
    %918 = vmatprep.subr.bf16.mxu0 0
    %919 = vmatpush2.bf16.msra.mxu0 %v649
    %920 = vmatprep.subr.bf16.mxu0 0
    %921 = vmatpush2.bf16.msra.mxu0 %v648
    %922 = vmatprep.mubr.bf16.mxu0 %v728
    %923 = vmatmul.mubr.bf16.gmra.mxu0 %v117
    %v924 = vpop.f32.mrf.mxu0
    %v925 = vadd.f32 %v885, %v924
    %v926 = vpop.f32.mrf.mxu0
    %v927 = vpop.f32.mrf.mxu0
    %v928 = vpop.f32.mrf.mxu0
    %929 = vdwg.mxu0
    %v930 = vmax.f32 %v925, 0.0
    %v931 = vpack.c.bf16 %v930, %v930
    %v932 = vld [vmem:[#allocation6] sm:$0xf]
    %v933 = vld [vmem:[#allocation6 + $0x4] sm:$0xf]
    %v934 = vld [vmem:[#allocation6 + $0x8] sm:$0xf]
    %v935 = vld [vmem:[#allocation6 + $0xc] sm:$0xf]
    %v936 = vld [vmem:[#allocation6 + $0x10] sm:$0xf]
    %v937 = vld [vmem:[#allocation6 + $0x14] sm:$0xf]
    %v938 = vld [vmem:[#allocation6 + $0x18] sm:$0xf]
    %v939 = vld [vmem:[#allocation6 + $0x1c] sm:$0xf]
    %v940 = vld [vmem:[#allocation6 + $0x20] sm:$0xf]
    %v941 = vld [vmem:[#allocation6 + $0x24] sm:$0xf]
    %v942 = vld [vmem:[#allocation6 + $0x28] sm:$0xf]
    %v943 = vld [vmem:[#allocation6 + $0x2c] sm:$0xf]
    %v944 = vld [vmem:[#allocation6 + $0x30] sm:$0xf]
    %v945 = vld [vmem:[#allocation6 + $0x34] sm:$0xf]
    %v946 = vld [vmem:[#allocation6 + $0x38] sm:$0xf]
    %v947 = vld [vmem:[#allocation6 + $0x3c] sm:$0xf]
    %v948 = vld [vmem:[%s4] sm:$0x1]
    %v950 = vlaneseq
    %v951 = vshrl.u32 %v950, 7
    %v952 = vsub.s32 0, %v951
    %v953 = vrot.slane %v948, %v952
    %v971 = vunpack.c.l.b16 %v932
    %v972 = vunpack.c.l.b16 %v933
    %v973 = vunpack.c.l.b16 %v934
    %v974 = vunpack.c.l.b16 %v935
    %v975 = vunpack.c.l.b16 %v936
    %v976 = vunpack.c.l.b16 %v937
    %v977 = vunpack.c.l.b16 %v938
    %v978 = vunpack.c.l.b16 %v939
    %v979 = vunpack.c.l.b16 %v940
    %v980 = vunpack.c.l.b16 %v941
    %v981 = vunpack.c.l.b16 %v942
    %v982 = vunpack.c.l.b16 %v943
    %v983 = vunpack.c.l.b16 %v944
    %v984 = vunpack.c.l.b16 %v945
    %v985 = vunpack.c.l.b16 %v946
    %v986 = vunpack.c.l.b16 %v947
    %v987 = vpack.c.b16 %v972, %v971
    %v988 = vpack.c.b16 %v974, %v973
    %v989 = vpack.c.b16 %v976, %v975
    %v990 = vpack.c.b16 %v978, %v977
    %v991 = vpack.c.b16 %v980, %v979
    %v992 = vpack.c.b16 %v982, %v981
    %v993 = vpack.c.b16 %v984, %v983
    %v994 = vpack.c.b16 %v986, %v985
    %1003 = vmatprep.subr.bf16.mxu0 0
    %1004 = vmatpush1.bf16.msra.mxu0 %v994
    %1005 = vmatprep.subr.bf16.mxu0 0
    %1006 = vmatpush1.bf16.msra.mxu0 %v993
    %1007 = vmatprep.subr.bf16.mxu0 0
    %1008 = vmatpush1.bf16.msra.mxu0 %v992
    %1009 = vmatprep.subr.bf16.mxu0 0
    %1010 = vmatpush1.bf16.msra.mxu0 %v991
    %1011 = vmatprep.subr.bf16.mxu0 0
    %1012 = vmatpush1.bf16.msra.mxu0 %v990
    %1013 = vmatprep.subr.bf16.mxu0 0
    %1014 = vmatpush1.bf16.msra.mxu0 %v989
    %1015 = vmatprep.subr.bf16.mxu0 0
    %1016 = vmatpush1.bf16.msra.mxu0 %v988
    %1017 = vmatprep.subr.bf16.mxu0 0
    %1018 = vmatpush1.bf16.msra.mxu0 %v987
    %1019 = vmatprep.subr.bf16.mxu0 0
    %1020 = vmatpush2.bf16.msra.mxu0 0
    %1021 = vmatprep.subr.bf16.mxu0 0
    %1022 = vmatpush2.bf16.msra.mxu0 0
    %1023 = vmatprep.subr.bf16.mxu0 0
    %1024 = vmatpush2.bf16.msra.mxu0 0
    %1025 = vmatprep.subr.bf16.mxu0 0
    %1026 = vmatpush2.bf16.msra.mxu0 0
    %1027 = vmatprep.subr.bf16.mxu0 0
    %1028 = vmatpush2.bf16.msra.mxu0 0
    %1029 = vmatprep.subr.bf16.mxu0 0
    %1030 = vmatpush2.bf16.msra.mxu0 0
    %1031 = vmatprep.subr.bf16.mxu0 0
    %1032 = vmatpush2.bf16.msra.mxu0 0
    %1033 = vmatprep.subr.bf16.mxu0 0
    %1034 = vmatpush2.bf16.msra.mxu0 0
    %1035 = vmatprep.mubr.bf16.mxu0 0
    %1036 = vmatmul.mubr.bf16.gmra.mxu0 %v931
    %v1037 = vpop.f32.mrf.mxu0
    %v1038 = vadd.f32 %v953, %v1037
    %v1039 = vpop.f32.mrf.mxu0
    %v1040 = vpop.f32.mrf.mxu0
    %v1041 = vpop.f32.mrf.mxu0
    %1042 = vdwg.mxu0
    %v1043 = vmax.f32 %v1038, 0.0
    %v1044 = vpack.c.bf16 %v1043, %v1043
    %v1045 = vld [vmem:[#allocation7] sm:$0xf]
    %v1046 = vld [vmem:[#allocation7 + $0x4] sm:$0xf]
    %v1047 = vld [vmem:[#allocation7 + $0x8] sm:$0xf]
    %v1048 = vld [vmem:[#allocation7 + $0xc] sm:$0xf]
    %v1049 = vld [vmem:[#allocation7 + $0x10] sm:$0xf]
    %v1050 = vld [vmem:[#allocation7 + $0x14] sm:$0xf]
    %v1051 = vld [vmem:[#allocation7 + $0x18] sm:$0xf]
    %v1052 = vld [vmem:[#allocation7 + $0x1c] sm:$0xf]
    %v1053 = vld [vmem:[#allocation7 + $0x20] sm:$0xf]
    %v1054 = vld [vmem:[#allocation7 + $0x24] sm:$0xf]
    %v1055 = vld [vmem:[#allocation7 + $0x28] sm:$0xf]
    %v1056 = vld [vmem:[#allocation7 + $0x2c] sm:$0xf]
    %v1057 = vld [vmem:[#allocation7 + $0x30] sm:$0xf]
    %v1058 = vld [vmem:[#allocation7 + $0x34] sm:$0xf]
    %v1059 = vld [vmem:[#allocation7 + $0x38] sm:$0xf]
    %v1060 = vld [vmem:[#allocation7 + $0x3c] sm:$0xf]
    %v1061 = vld [vmem:[%s6] sm:$0x1]
    %v1063 = vlaneseq
    %v1064 = vshrl.u32 %v1063, 7
    %v1065 = vsub.s32 0, %v1064
    %v1066 = vrot.slane %v1061, %v1065
    %v1084 = vunpack.c.l.b16 %v1045
    %v1085 = vunpack.c.l.b16 %v1046
    %v1086 = vunpack.c.l.b16 %v1047
    %v1087 = vunpack.c.l.b16 %v1048
    %v1088 = vunpack.c.l.b16 %v1049
    %v1089 = vunpack.c.l.b16 %v1050
    %v1090 = vunpack.c.l.b16 %v1051
    %v1091 = vunpack.c.l.b16 %v1052
    %v1092 = vunpack.c.l.b16 %v1053
    %v1093 = vunpack.c.l.b16 %v1054
    %v1094 = vunpack.c.l.b16 %v1055
    %v1095 = vunpack.c.l.b16 %v1056
    %v1096 = vunpack.c.l.b16 %v1057
    %v1097 = vunpack.c.l.b16 %v1058
    %v1098 = vunpack.c.l.b16 %v1059
    %v1099 = vunpack.c.l.b16 %v1060
    %v1100 = vpack.c.b16 %v1085, %v1084
    %v1101 = vpack.c.b16 %v1087, %v1086
    %v1102 = vpack.c.b16 %v1089, %v1088
    %v1103 = vpack.c.b16 %v1091, %v1090
    %v1104 = vpack.c.b16 %v1093, %v1092
    %v1105 = vpack.c.b16 %v1095, %v1094
    %v1106 = vpack.c.b16 %v1097, %v1096
    %v1107 = vpack.c.b16 %v1099, %v1098
    %1116 = vmatprep.subr.bf16.mxu0 0
    %1117 = vmatpush1.bf16.msra.mxu0 %v1107
    %1118 = vmatprep.subr.bf16.mxu0 0
    %1119 = vmatpush1.bf16.msra.mxu0 %v1106
    %1120 = vmatprep.subr.bf16.mxu0 0
    %1121 = vmatpush1.bf16.msra.mxu0 %v1105
    %1122 = vmatprep.subr.bf16.mxu0 0
    %1123 = vmatpush1.bf16.msra.mxu0 %v1104
    %1124 = vmatprep.subr.bf16.mxu0 0
    %1125 = vmatpush1.bf16.msra.mxu0 %v1103
    %1126 = vmatprep.subr.bf16.mxu0 0
    %1127 = vmatpush1.bf16.msra.mxu0 %v1102
    %1128 = vmatprep.subr.bf16.mxu0 0
    %1129 = vmatpush1.bf16.msra.mxu0 %v1101
    %1130 = vmatprep.subr.bf16.mxu0 0
    %1131 = vmatpush1.bf16.msra.mxu0 %v1100
    %1132 = vmatprep.subr.bf16.mxu0 0
    %1133 = vmatpush2.bf16.msra.mxu0 0
    %1134 = vmatprep.subr.bf16.mxu0 0
    %1135 = vmatpush2.bf16.msra.mxu0 0
    %1136 = vmatprep.subr.bf16.mxu0 0
    %1137 = vmatpush2.bf16.msra.mxu0 0
    %1138 = vmatprep.subr.bf16.mxu0 0
    %1139 = vmatpush2.bf16.msra.mxu0 0
    %1140 = vmatprep.subr.bf16.mxu0 0
    %1141 = vmatpush2.bf16.msra.mxu0 0
    %1142 = vmatprep.subr.bf16.mxu0 0
    %1143 = vmatpush2.bf16.msra.mxu0 0
    %1144 = vmatprep.subr.bf16.mxu0 0
    %1145 = vmatpush2.bf16.msra.mxu0 0
    %1146 = vmatprep.subr.bf16.mxu0 0
    %1147 = vmatpush2.bf16.msra.mxu0 0
    %1148 = vmatprep.mubr.bf16.mxu0 0
    %1149 = vmatmul.mubr.bf16.gmra.mxu0 %v1044
    %v1150 = vpop.f32.mrf.mxu0
    %v1151 = vadd.f32 %v1066, %v1150
    %v1152 = vpop.f32.mrf.mxu0
    %v1153 = vpop.f32.mrf.mxu0
    %v1154 = vpop.f32.mrf.mxu0
    %1155 = vdwg.mxu0
    %v1156 = vmax.f32 %v1151, 0.0
    %v1157 = vpack.c.bf16 %v1156, %v1156
    %v1158 = vld [vmem:[#allocation9] sm:$0xf]
    %v1159 = vld [vmem:[#allocation9 + $0x4] sm:$0xf]
    %v1160 = vld [vmem:[#allocation9 + $0x8] sm:$0xf]
    %v1161 = vld [vmem:[#allocation9 + $0xc] sm:$0xf]
    %v1162 = vld [vmem:[#allocation9 + $0x10] sm:$0xf]
    %v1163 = vld [vmem:[#allocation9 + $0x14] sm:$0xf]
    %v1164 = vld [vmem:[#allocation9 + $0x18] sm:$0xf]
    %v1165 = vld [vmem:[#allocation9 + $0x1c] sm:$0xf]
    %v1166 = vld [vmem:[#allocation9 + $0x20] sm:$0xf]
    %v1167 = vld [vmem:[#allocation9 + $0x24] sm:$0xf]
    %v1168 = vld [vmem:[#allocation9 + $0x28] sm:$0xf]
    %v1169 = vld [vmem:[#allocation9 + $0x2c] sm:$0xf]
    %v1170 = vld [vmem:[#allocation9 + $0x30] sm:$0xf]
    %v1171 = vld [vmem:[#allocation9 + $0x34] sm:$0xf]
    %v1172 = vld [vmem:[#allocation9 + $0x38] sm:$0xf]
    %v1173 = vld [vmem:[#allocation9 + $0x3c] sm:$0xf]
    %v1174 = vld [vmem:[%s8] sm:$0x1]
    %v1176 = vlaneseq
    %v1177 = vshrl.u32 %v1176, 7
    %v1178 = vsub.s32 0, %v1177
    %v1179 = vrot.slane %v1174, %v1178
    %v1197 = vunpack.c.l.b16 %v1158
    %v1198 = vunpack.c.l.b16 %v1159
    %v1199 = vunpack.c.l.b16 %v1160
    %v1200 = vunpack.c.l.b16 %v1161
    %v1201 = vunpack.c.l.b16 %v1162
    %v1202 = vunpack.c.l.b16 %v1163
    %v1203 = vunpack.c.l.b16 %v1164
    %v1204 = vunpack.c.l.b16 %v1165
    %v1205 = vunpack.c.l.b16 %v1166
    %v1206 = vunpack.c.l.b16 %v1167
    %v1207 = vunpack.c.l.b16 %v1168
    %v1208 = vunpack.c.l.b16 %v1169
    %v1209 = vunpack.c.l.b16 %v1170
    %v1210 = vunpack.c.l.b16 %v1171
    %v1211 = vunpack.c.l.b16 %v1172
    %v1212 = vunpack.c.l.b16 %v1173
    %v1213 = vpack.c.b16 %v1198, %v1197
    %v1214 = vpack.c.b16 %v1200, %v1199
    %v1215 = vpack.c.b16 %v1202, %v1201
    %v1216 = vpack.c.b16 %v1204, %v1203
    %v1217 = vpack.c.b16 %v1206, %v1205
    %v1218 = vpack.c.b16 %v1208, %v1207
    %v1219 = vpack.c.b16 %v1210, %v1209
    %v1220 = vpack.c.b16 %v1212, %v1211
    %1229 = vmatprep.subr.bf16.mxu0 0
    %1230 = vmatpush1.bf16.msra.mxu0 %v1220
    %1231 = vmatprep.subr.bf16.mxu0 0
    %1232 = vmatpush1.bf16.msra.mxu0 %v1219
    %1233 = vmatprep.subr.bf16.mxu0 0
    %1234 = vmatpush1.bf16.msra.mxu0 %v1218
    %1235 = vmatprep.subr.bf16.mxu0 0
    %1236 = vmatpush1.bf16.msra.mxu0 %v1217
    %1237 = vmatprep.subr.bf16.mxu0 0
    %1238 = vmatpush1.bf16.msra.mxu0 %v1216
    %1239 = vmatprep.subr.bf16.mxu0 0
    %1240 = vmatpush1.bf16.msra.mxu0 %v1215
    %1241 = vmatprep.subr.bf16.mxu0 0
    %1242 = vmatpush1.bf16.msra.mxu0 %v1214
    %1243 = vmatprep.subr.bf16.mxu0 0
    %1244 = vmatpush1.bf16.msra.mxu0 %v1213
    %1245 = vmatprep.subr.bf16.mxu0 0
    %1246 = vmatpush2.bf16.msra.mxu0 0
    %1247 = vmatprep.subr.bf16.mxu0 0
    %1248 = vmatpush2.bf16.msra.mxu0 0
    %1249 = vmatprep.subr.bf16.mxu0 0
    %1250 = vmatpush2.bf16.msra.mxu0 0
    %1251 = vmatprep.subr.bf16.mxu0 0
    %1252 = vmatpush2.bf16.msra.mxu0 0
    %1253 = vmatprep.subr.bf16.mxu0 0
    %1254 = vmatpush2.bf16.msra.mxu0 0
    %1255 = vmatprep.subr.bf16.mxu0 0
    %1256 = vmatpush2.bf16.msra.mxu0 0
    %1257 = vmatprep.subr.bf16.mxu0 0
    %1258 = vmatpush2.bf16.msra.mxu0 0
    %1259 = vmatprep.subr.bf16.mxu0 0
    %1260 = vmatpush2.bf16.msra.mxu0 0
    %1261 = vmatprep.mubr.bf16.mxu0 0
    %1262 = vmatmul.mubr.bf16.gmra.mxu0 %v1157
    %v1263 = vpop.f32.mrf.mxu0
    %v1264 = vadd.f32 %v1179, %v1263
    %v1265 = vpop.f32.mrf.mxu0
    %v1266 = vpop.f32.mrf.mxu0
    %v1267 = vpop.f32.mrf.mxu0
    %1268 = vdwg.mxu0
    %v1269 = vpack.c.bf16 %v1264, %v1264
    %1270 = vst [vmem:[%s9] sm:$0xf] %v1269
    // Predicated region
    $region58: #{mlp_forward.1} parent=1 // pred_check
      _
    $region59: #{mlp_forward.1} parent=1 // pred_check_branch
      %1272 = sbr.rel (0) target = $region61
    $region60: #{mlp_forward.1} parent=1 // pred_region
      _
    $region61: #{mlp_forward.1} parent=1 // pred_fallthru
      _
    // Predicated region
    $region62: #{mlp_forward.1} parent=1 // pred_check
      _
    $region63: #{mlp_forward.1} parent=1 // pred_check_branch
      %1274 = sbr.rel (0) target = $region65
    $region64: #{mlp_forward.1} parent=1 // pred_region
      _
    $region65: #{mlp_forward.1} parent=1 // pred_fallthru
      _
    %1275 = vsyncpa [#allocation3], 1
    %1276 = vsyncpa [#allocation5], 1
    %1277 = vsyncpa [#allocation8], 1

</llo_original>
